<compile_context>
chip_gen: v5e
topology: v5e:2x2
jax: 0.10.0
libtpu: 0.0.40
codegen_flags: <defaults>
</compile_context>

<pallas_src>
import functools

import jax
import jax.numpy as jnp
import numpy as np
from jax import lax
from jax.experimental import pallas as pl
from jax.experimental.pallas import tpu as pltpu


def _cdiv(a, b):
    return (a + b - 1) // b


def _rup(a, b):
    return _cdiv(a, b) * b


def _modified_chebyshev_kernel(y_ref, a_ref, b_ref, d_ref, o_ref, *,
                               M, CHUNK, NCHUNKS, use_min):
    # Tiny VMEM-resident tables (M x WR_pad) -> a handful of vregs, loaded once.
    A = a_ref[...]
    B = b_ref[...]
    D = d_ref[...]
    red = jnp.minimum if use_min else jnp.maximum

    def chunk_body(c, carry):
        row0 = c * CHUNK
        if not isinstance(row0, int):
            row0 = pl.multiple_of(row0, CHUNK)
        yc = y_ref[pl.ds(row0, CHUNK), :]                            # (CHUNK, M), narrow read
        # beta * sum_m wd  ==  yc @ D  (constant part already folded into A).
        # K = M is tiny, but the MXU is otherwise idle -> free filler; removes the
        # second full-width accumulator from the VALU path.
        pen = jnp.dot(yc, D, preferred_element_type=jnp.float32)    # (CHUNK, WR_pad)
        # Running min/max over m of sign*wd (all signs folded into A/B); kept
        # register-resident for this CHUNK-row strip. M is small & static -> unrolled.
        # TODO(synk): confirm in the bundle dump that the yc[:, m:m+1] lane-broadcast
        # lands on the XLU; if it emits VALU copy chains, route it via MXU rank-1 dots.
        red_acc = A[0:1, :] + yc[:, 0:1] * B[0:1, :]
        for m in range(1, M):
            red_acc = red(red_acc, A[m:m + 1, :] + yc[:, m:m + 1] * B[m:m + 1, :])
        o_ref[pl.ds(row0, CHUNK), :] = red_acc + pen
        return carry

    if NCHUNKS == 1:
        chunk_body(0, 0)
    else:
        lax.fori_loop(0, NCHUNKS, chunk_body, 0)


def modified_chebyshev_scalarization(Y, weights, ref_points, *, beta=0.05,
                                     invert=False, pseudo=False, negate=True):
    """Pallas-backed forward pass of ModifiedChebyshevScalarization.

    Args:
        Y:          (num_points, M) float32
        weights:    (num_weights, M) float32
        ref_points: (num_ref, M) float32

    Returns:
        (num_points, num_weights * num_ref) float32
    """
    Y = jnp.asarray(Y, jnp.float32)
    weights = jnp.asarray(weights, jnp.float32)
    ref_points = jnp.asarray(ref_points, jnp.float32)

    N, M = Y.shape
    W = weights.shape[0]
    R = ref_points.shape[0]
    WR = W * R

    sign = -1.0 if negate else 1.0
    sign_res = -1.0 if invert else 1.0
    ss = sign * sign_res

    # Lane-dense flat tables (tiny: M x WR); flattening order matches torch.flatten -> w*R + r.
    wflat = jnp.repeat(weights, R, axis=0).T                                    # (M, WR)
    wrprod = (weights[:, None, :] * ref_points[None, :, :]).reshape(WR, M).T    # (M, WR)

    WR_pad = max(128, _rup(WR, 128))
    if WR_pad != WR:
        pad = WR_pad - WR
        wflat = jnp.pad(wflat, ((0, 0), (0, pad)))      # zero lanes -> finite, sliced off later
        wrprod = jnp.pad(wrprod, ((0, 0), (0, pad)))

    # Fold every sign/beta factor into the tables so the kernel's inner loop is
    # one fma + one min/max per (m, element), plus a single MXU matmul per chunk.
    A = ss * wrprod + (beta * sign_res) * jnp.sum(wrprod, axis=0, keepdims=True)
    B = (-ss) * wflat
    D = (-beta * sign_res) * wflat
    use_min = bool(negate) != bool(pseudo)   # sign flip folded into the reduction direction

    # ---- tiling -------------------------------------------------------------
    # In-kernel row strip: small enough that red_acc / pen / the current term stay
    # in vregs (<= ~8K f32 per live value), multiple of the 8-sublane tile.
    CHUNK = max(8, min(128, (8192 // WR_pad) // 8 * 8))
    CHUNK = min(CHUNK, _rup(N, 8))           # don't over-pad tiny problems

    try:
        vmem_cap = int(pltpu.get_tpu_info().vmem_capacity_bytes)
    except Exception:
        vmem_cap = 64 * 1024 * 1024
    # Per-output-buffer budget: larger tiles on 128 MiB parts (v5e/v6e), conservative
    # on v7x (64 MiB physical VMEM per TensorCore).
    out_buf_budget = (16 << 20) if vmem_cap >= (96 << 20) else (8 << 20)

    rows_budget = max(CHUNK, (out_buf_budget // (WR_pad * 4)) // CHUNK * CHUNK)
    TN_cap = min(rows_budget, max(CHUNK, (2048 // CHUNK) * CHUNK))

    num_tiles = _cdiv(N, TN_cap)
    if num_tiles == 1 and N >= 2 * CHUNK:
        num_tiles = 2                        # >= 2 parallel grid steps: keeps both v7x TCs busy
    TN = _rup(_cdiv(N, num_tiles), CHUNK)    # balanced tiles -> no nearly-empty tail tile
    N_pad = num_tiles * TN
    NCHUNKS = TN // CHUNK

    Y_pad = jnp.pad(Y, ((0, N_pad - N), (0, 0))) if N_pad != N else Y

    # Size the VMEM request to the actual footprint (double-buffered Y/out + tables) + slack,
    # leaving headroom below v7x's 64 MiB physical VMEM.
    vmem_need = 4 * (2 * TN * M + 2 * TN * WR_pad + 6 * M * WR_pad) + (4 << 20)
    vmem_limit = int(min(max(vmem_need, 8 << 20), max(vmem_cap - (16 << 20), 32 << 20)))

    kernel = functools.partial(
        _modified_chebyshev_kernel,
        M=M, CHUNK=CHUNK, NCHUNKS=NCHUNKS, use_min=use_min,
    )

    out = pl.pallas_call(
        kernel,
        out_shape=jax.ShapeDtypeStruct((N_pad, WR_pad), jnp.float32),
        grid=(num_tiles,),
        in_specs=[
            pl.BlockSpec((TN, M), lambda i: (i, 0)),         # Y tile (streamed over grid)
            pl.BlockSpec((M, WR_pad), lambda i: (0, 0)),     # A table (VMEM resident)
            pl.BlockSpec((M, WR_pad), lambda i: (0, 0)),     # B table
            pl.BlockSpec((M, WR_pad), lambda i: (0, 0)),     # D table
        ],
        out_specs=pl.BlockSpec((TN, WR_pad), lambda i: (i, 0)),  # lane-dense output tile
        compiler_params=pltpu.CompilerParams(
            dimension_semantics=("parallel",),
            vmem_limit_bytes=vmem_limit,
        ),
    )(Y_pad, A, B, D)

    # forward() flattens the last num_params=2 dims -> (N, W*R); drop padding.
    return out[:N, :WR]


def _reference(Y, weights, ref_points, *, beta=0.05, invert=False, pseudo=False, negate=True):
    """Pure-JAX reference mirroring the PyTorch module exactly."""
    sign = -1.0 if negate else 1.0
    sign_res = -1.0 if invert else 1.0
    diff = sign_res * (ref_points[None, :, :] - Y[:, None, :])          # (N, R, M)
    wd = weights[None, :, None, :] * diff[:, None, :, :]                # (N, W, R, M)
    penalty = sign * jnp.sum(wd, axis=-1, keepdims=True)                # (N, W, R, 1)
    if pseudo:
        val = jnp.min(wd + beta * penalty, axis=-1)
    else:
        val = jnp.max(wd + beta * penalty, axis=-1)
    return (sign * val).reshape(Y.shape[0], -1)                         # (N, W*R)


def _check(Y, weights, ref_points, **kwargs):
    out = jax.block_until_ready(modified_chebyshev_scalarization(Y, weights, ref_points, **kwargs))
    exp = _reference(Y, weights, ref_points, **kwargs)
    # Tolerance covers the case where the MXU penalty matmul runs at default (bf16-pass)
    # precision; the penalty term carries beta, so any residual error is << 5e-3 while
    # genuine sign/algebra bugs would be O(1).
    np.testing.assert_allclose(np.asarray(out), np.asarray(exp), rtol=5e-3, atol=5e-3)
    return out


if __name__ == "__main__":
    key = jax.random.PRNGKey(0)
    k_y, k_w, k_r, k_y2, k_w2, k_r2 = jax.random.split(key, 6)

    # Small primary shapes.
    num_points, M = 8, 4
    num_weights, num_ref = 5, 3
    Y = jax.random.normal(k_y, (num_points, M), dtype=jnp.float32)
    weights = jax.random.uniform(k_w, (num_weights, M), dtype=jnp.float32, minval=0.1, maxval=1.0)
    ref_points = jax.random.normal(k_r, (num_ref, M), dtype=jnp.float32) - 0.5

    out = _check(Y, weights, ref_points)                                        # defaults
    assert out.shape == (num_points, num_weights * num_ref), out.shape
    _check(Y, weights, ref_points, beta=0.1, invert=True, pseudo=True, negate=False)
    _check(Y, weights, ref_points, beta=0.2, invert=False, pseudo=True, negate=True)
    _check(Y, weights, ref_points, beta=0.05, invert=True, pseudo=False, negate=False)

    # Moderate shape: exercises the in-kernel strip-mine loop (NCHUNKS > 1),
    # balanced N tiling / padding, and the 2-step parallel grid.
    Y2 = jax.random.normal(k_y2, (300, 5), dtype=jnp.float32)
    w2 = jax.random.uniform(k_w2, (9, 5), dtype=jnp.float32, minval=0.1, maxval=1.0)
    r2 = jax.random.normal(k_r2, (4, 5), dtype=jnp.float32) - 0.5
    out2 = _check(Y2, w2, r2)
    assert out2.shape == (300, 36), out2.shape

    # Shape with W*R > 128: exercises lane padding + smaller row chunks.
    Y3 = jax.random.normal(k_y, (100, 4), dtype=jnp.float32)
    w3 = jax.random.uniform(k_w, (20, 4), dtype=jnp.float32, minval=0.1, maxval=1.0)
    r3 = jax.random.normal(k_r, (9, 4), dtype=jnp.float32) - 0.5
    out3 = _check(Y3, w3, r3)
    assert out3.shape == (100, 180), out3.shape

    print("KERNEL_OK")
</pallas_src>

<mosaic_0001>
module attributes {stable_mosaic.version = 11 : i64} {
  func.func @_modified_chebyshev_kernel(%arg0: i32, %arg1: memref<8x4xf32, #tpu.memory_space<vmem>>, %arg2: memref<4x128xf32, #tpu.memory_space<vmem>>, %arg3: memref<4x128xf32, #tpu.memory_space<vmem>>, %arg4: memref<4x128xf32, #tpu.memory_space<vmem>>, %arg5: memref<8x128xf32, #tpu.memory_space<vmem>>) attributes {dimension_semantics = [#tpu.dimension_semantics<parallel>], iteration_bounds = array<i64: 1>, scalar_prefetch = 0 : i64, scratch_operands = 0 : i64, tpu.core_type = #tpu.core_type<tc>, window_params = [{transform_indices = @transform_0, window_bounds = array<i64: 8, 4>}, {pipeline_mode = #tpu.pipeline_mode<synchronous>, transform_indices = @transform_1, window_bounds = array<i64: 4, 128>}, {pipeline_mode = #tpu.pipeline_mode<synchronous>, transform_indices = @transform_2, window_bounds = array<i64: 4, 128>}, {pipeline_mode = #tpu.pipeline_mode<synchronous>, transform_indices = @transform_3, window_bounds = array<i64: 4, 128>}, {transform_indices = @transform_4, window_bounds = array<i64: 8, 128>}]} {
    %c0 = arith.constant 0 : index
    %c0_0 = arith.constant 0 : index
    %0 = vector.load %arg2[%c0, %c0_0] : memref<4x128xf32, #tpu.memory_space<vmem>>, vector<4x128xf32>
    %c0_1 = arith.constant 0 : index
    %c0_2 = arith.constant 0 : index
    %1 = vector.load %arg3[%c0_1, %c0_2] : memref<4x128xf32, #tpu.memory_space<vmem>>, vector<4x128xf32>
    %c0_3 = arith.constant 0 : index
    %c0_4 = arith.constant 0 : index
    %2 = vector.load %arg4[%c0_3, %c0_4] : memref<4x128xf32, #tpu.memory_space<vmem>>, vector<4x128xf32>
    %c0_5 = arith.constant 0 : index
    %c0_6 = arith.constant 0 : index
    %3 = vector.load %arg1[%c0_5, %c0_6] : memref<8x4xf32, #tpu.memory_space<vmem>>, vector<8x4xf32>
    %cst = arith.constant dense<0.000000e+00> : vector<8x128xf32>
    %4 = tpu.matmul %3, %2, %cst {dimension_numbers = #tpu.dot_dimension_numbers<[1], [0], [0], [1], [0, 0, 1, 1], [], []>} : vector<8x4xf32>, vector<4x128xf32>, vector<8x128xf32> -> vector<8x128xf32>
    %5 = vector.extract_strided_slice %0 {offsets = [0, 0], sizes = [1, 128], strides = [1, 1]} : vector<4x128xf32> to vector<1x128xf32>
    %6 = vector.extract_strided_slice %3 {offsets = [0, 0], sizes = [8, 1], strides = [1, 1]} : vector<8x4xf32> to vector<8x1xf32>
    %7 = vector.extract_strided_slice %1 {offsets = [0, 0], sizes = [1, 128], strides = [1, 1]} : vector<4x128xf32> to vector<1x128xf32>
    %8 = vector.broadcast %6 : vector<8x1xf32> to vector<8x128xf32>
    %9 = vector.broadcast %7 : vector<1x128xf32> to vector<8x128xf32>
    %10 = arith.mulf %8, %9 : vector<8x128xf32>
    %11 = vector.broadcast %5 : vector<1x128xf32> to vector<8x128xf32>
    %12 = arith.addf %11, %10 : vector<8x128xf32>
    %13 = vector.extract_strided_slice %0 {offsets = [1, 0], sizes = [1, 128], strides = [1, 1]} : vector<4x128xf32> to vector<1x128xf32>
    %14 = vector.extract_strided_slice %3 {offsets = [0, 1], sizes = [8, 1], strides = [1, 1]} : vector<8x4xf32> to vector<8x1xf32>
    %15 = vector.extract_strided_slice %1 {offsets = [1, 0], sizes = [1, 128], strides = [1, 1]} : vector<4x128xf32> to vector<1x128xf32>
    %16 = vector.broadcast %14 : vector<8x1xf32> to vector<8x128xf32>
    %17 = vector.broadcast %15 : vector<1x128xf32> to vector<8x128xf32>
    %18 = arith.mulf %16, %17 : vector<8x128xf32>
    %19 = vector.broadcast %13 : vector<1x128xf32> to vector<8x128xf32>
    %20 = arith.addf %19, %18 : vector<8x128xf32>
    %21 = arith.minimumf %12, %20 : vector<8x128xf32>
    %22 = vector.extract_strided_slice %0 {offsets = [2, 0], sizes = [1, 128], strides = [1, 1]} : vector<4x128xf32> to vector<1x128xf32>
    %23 = vector.extract_strided_slice %3 {offsets = [0, 2], sizes = [8, 1], strides = [1, 1]} : vector<8x4xf32> to vector<8x1xf32>
    %24 = vector.extract_strided_slice %1 {offsets = [2, 0], sizes = [1, 128], strides = [1, 1]} : vector<4x128xf32> to vector<1x128xf32>
    %25 = vector.broadcast %23 : vector<8x1xf32> to vector<8x128xf32>
    %26 = vector.broadcast %24 : vector<1x128xf32> to vector<8x128xf32>
    %27 = arith.mulf %25, %26 : vector<8x128xf32>
    %28 = vector.broadcast %22 : vector<1x128xf32> to vector<8x128xf32>
    %29 = arith.addf %28, %27 : vector<8x128xf32>
    %30 = arith.minimumf %21, %29 : vector<8x128xf32>
    %31 = vector.extract_strided_slice %0 {offsets = [3, 0], sizes = [1, 128], strides = [1, 1]} : vector<4x128xf32> to vector<1x128xf32>
    %32 = vector.extract_strided_slice %3 {offsets = [0, 3], sizes = [8, 1], strides = [1, 1]} : vector<8x4xf32> to vector<8x1xf32>
    %33 = vector.extract_strided_slice %1 {offsets = [3, 0], sizes = [1, 128], strides = [1, 1]} : vector<4x128xf32> to vector<1x128xf32>
    %34 = vector.broadcast %32 : vector<8x1xf32> to vector<8x128xf32>
    %35 = vector.broadcast %33 : vector<1x128xf32> to vector<8x128xf32>
    %36 = arith.mulf %34, %35 : vector<8x128xf32>
    %37 = vector.broadcast %31 : vector<1x128xf32> to vector<8x128xf32>
    %38 = arith.addf %37, %36 : vector<8x128xf32>
    %39 = arith.minimumf %30, %38 : vector<8x128xf32>
    %40 = arith.addf %39, %4 : vector<8x128xf32>
    %c0_7 = arith.constant 0 : index
    %c0_8 = arith.constant 0 : index
    %41 = vector.load %arg5[%c0_7, %c0_8] : memref<8x128xf32, #tpu.memory_space<vmem>>, vector<8x128xf32>
    tpu.vector_store %arg5[%c0_7, %c0_8], %40 {strides = array<i32>} : memref<8x128xf32, #tpu.memory_space<vmem>>, vector<8x128xf32>,
    return
  }
  func.func @transform_0(%arg0: i32) -> (i32, i32) {
    %c0_i32 = arith.constant 0 : i32
    %c0_i32_0 = arith.constant 0 : i32
    return %arg0, %c0_i32 : i32, i32
  }
  func.func @transform_1(%arg0: i32) -> (i32, i32) {
    %c0_i32 = arith.constant 0 : i32
    %c0_i32_0 = arith.constant 0 : i32
    %c0_i32_1 = arith.constant 0 : i32
    return %c0_i32, %c0_i32_0 : i32, i32
  }
  func.func @transform_2(%arg0: i32) -> (i32, i32) {
    %c0_i32 = arith.constant 0 : i32
    %c0_i32_0 = arith.constant 0 : i32
    %c0_i32_1 = arith.constant 0 : i32
    return %c0_i32, %c0_i32_0 : i32, i32
  }
  func.func @transform_3(%arg0: i32) -> (i32, i32) {
    %c0_i32 = arith.constant 0 : i32
    %c0_i32_0 = arith.constant 0 : i32
    %c0_i32_1 = arith.constant 0 : i32
    return %c0_i32, %c0_i32_0 : i32, i32
  }
  func.func @transform_4(%arg0: i32) -> (i32, i32) {
    %c0_i32 = arith.constant 0 : i32
    %c0_i32_0 = arith.constant 0 : i32
    return %arg0, %c0_i32 : i32, i32
  }
}

</mosaic_0001>

<llo_original>
// kernel: tpu_custom_call.1
$region0: #{tpu_custom_call.1}
  #allocation0 [shape = 'u32[]', space=smem, size = 0x4, offset = 0x4, fixed_abs, tag = 'smem constant byte address 0x4 - core index']
  #allocation1 [shape = 'u32[72,128]{1,0:T(1,128)}', space=vmem, size = 0x9000, scoped, tag = 'internal scratch']
  %s0 = inlined_call_operand.vmem [shape: f32[8,4], index: 0, kind: input, shape index: {}]
  %s1 = inlined_call_operand.vmem [shape: f32[4,128], index: 1, kind: input, shape index: {}]
  %s2 = inlined_call_operand.vmem [shape: f32[4,128], index: 2, kind: input, shape index: {}]
  %s3 = inlined_call_operand.vmem [shape: f32[4,128], index: 3, kind: input, shape index: {}]
  %s4 = inlined_call_operand.hbm [shape: f32[8,128], index: 4, kind: output, shape index: {}]
  %s5 = sld [smem:[#allocation0]]
  $region26: #{tpu_custom_call.1} parent=0
    _
  %s7 = ssub.s32 1, %s5
  %s8 = scalar_select 0, %s7, %s5
  $region1: #{tpu_custom_call.1} parent=0
    #allocation2 [shape = 'u8[4096]{0}', space=vmem, size = 0x1000, scoped, tag = 'output window, operand 0, single buffered']
    #allocation3 [shape = 's32[1]{0}', space=sflag, size = 0x4, scoped, tag = 'scoped memory for tpu_custom_call.1']
    %9 = vsyncpa [#allocation3], 0
    // Predicated region
    $region2: #{tpu_custom_call.1} parent=1 // pred_check
      _
    $region3: #{tpu_custom_call.1} parent=1 // pred_check_branch
      %11 = sbr.rel (0) target = $region5
    $region4: #{tpu_custom_call.1} parent=1 // pred_region
      _
    $region5: #{tpu_custom_call.1} parent=1 // pred_fallthru
      _
    // Predicated region
    $region6: #{tpu_custom_call.1} parent=1 // pred_check
      _
    $region7: #{tpu_custom_call.1} parent=1 // pred_check_branch
      %13 = sbr.rel (0) target = $region9
    $region8: #{tpu_custom_call.1} parent=1 // pred_region
      _
    $region9: #{tpu_custom_call.1} parent=1 // pred_fallthru
      _
    // Predicated region
    $region10: #{tpu_custom_call.1} parent=1 // pred_check
      _
    $region11: #{tpu_custom_call.1} parent=1 // pred_check_branch
      %15 = sbr.rel (0) target = $region13
    $region12: #{tpu_custom_call.1} parent=1 // pred_region
      _
    $region13: #{tpu_custom_call.1} parent=1 // pred_fallthru
      _
    // Predicated region
    $region14: #{tpu_custom_call.1} parent=1 // pred_check
      _
    $region15: #{tpu_custom_call.1} parent=1 // pred_check_branch
      %17 = sbr.rel (0) target = $region17
    $region16: #{tpu_custom_call.1} parent=1 // pred_region
      _
    $region17: #{tpu_custom_call.1} parent=1 // pred_fallthru
      _
    %v18 = vld [vmem:[%s1] sm:$0xf]
    %v19 = vld [vmem:[%s2] sm:$0xf]
    %v20 = vld [vmem:[%s3] sm:$0xf]
    %v21 = vld [vmem:[%s0] sm:$0xff]
    %vm22 = vcmask 31744
    %v24 = vsel %vm22, %v21, 0
    %vm26 = vcmask 1043456
    %v28 = vsel %vm26, %v20, 0
    %30 = vmatpush.msra.mxu0 0.0
    %31 = vmatpush.msra.mxu0 0.0
    %32 = vmatpush.msra.mxu0 0.0
    %33 = vmatpush.msra.mxu0 0.0
    %34 = vmatpush.msra.mxu0 0.0
    %35 = vmatpush.msra.mxu0 0.0
    %36 = vmatpush.msra.mxu0 0.0
    %37 = vmatpush.msra.mxu0 0.0
    %38 = vmatpush.msra.mxu0 0.0
    %39 = vmatpush.msra.mxu0 0.0
    %40 = vmatpush.msra.mxu0 0.0
    %41 = vmatpush.msra.mxu0 0.0
    %42 = vmatpush.msra.mxu0 0.0
    %43 = vmatpush.msra.mxu0 0.0
    %44 = vmatpush.msra.mxu0 0.0
    %45 = vmatpush.msra.mxu0 %v28
    %46 = vmatmul.f32.gmra.mxu0 %v24
    %v47 = vpop.f32.mrf.mxu0
    %v48 = vadd.f32 0.0, %v47
    %49 = vdwg.mxu0
    %50 = vset.pattern.permute.xlu0 0
    %51 = vperm.xlu0 %50, %v21
    %v52 = vpop.permute.xlu0 %51
    %v54 = vperm.slane %v19, 0
    %v55 = vmul.f32 %v52, %v54
    %v56 = vperm.slane %v18, 0
    %v57 = vadd.f32 %v56, %v55
    %58 = vset.pattern.permute.xlu0 1
    %59 = vperm.xlu0 %58, %v21
    %v60 = vpop.permute.xlu0 %59
    %v62 = vperm.slane %v19, 1
    %v63 = vmul.f32 %v60, %v62
    %v64 = vperm.slane %v18, 1
    %v65 = vadd.f32 %v64, %v63
    %v66 = vmin.f32 %v57, %v65
    %67 = vset.pattern.permute.xlu0 2
    %68 = vperm.xlu0 %67, %v21
    %v69 = vpop.permute.xlu0 %68
    %v71 = vperm.slane %v19, 2
    %v72 = vmul.f32 %v69, %v71
    %v73 = vperm.slane %v18, 2
    %v74 = vadd.f32 %v73, %v72
    %v75 = vmin.f32 %v66, %v74
    %76 = vset.pattern.permute.xlu0 3
    %77 = vperm.xlu0 %76, %v21
    %v78 = vpop.permute.xlu0 %77
    %v80 = vperm.slane %v19, 3
    %v81 = vmul.f32 %v78, %v80
    %v82 = vperm.slane %v18, 3
    %v83 = vadd.f32 %v82, %v81
    %v84 = vmin.f32 %v75, %v83
    %v85 = vadd.f32 %v84, %v48
    %86 = vst [vmem:[#allocation2] sm:$0xff] %v85
    // Predicated region
    $region18: #{tpu_custom_call.1} parent=1 // pred_check
      _
    $region19: #{tpu_custom_call.1} parent=1 // pred_check_branch
      %88 = sbr.rel (0) target = $region21
    $region20: #{tpu_custom_call.1} parent=1 // pred_region
      %90 = vsyncadd [#allocation3], 0
      %s92 = sshll.u32 [#allocation2], 4
      %s93 = int_to_ptr.vmem [resolvable:$true] %s92
      %s94 = sshll.u32 %s4, 4
      %s95 = int_to_ptr.hbm [resolvable:$true] %s94
      %97 = dma.vmem_to_hbm [thread:$0]  %s93, 128, %s95, [#allocation3]
    $region21: #{tpu_custom_call.1} parent=1 // pred_fallthru
      _
    // Predicated region
    $region22: #{tpu_custom_call.1} parent=1 // pred_check
      _
    $region23: #{tpu_custom_call.1} parent=1 // pred_check_branch
      %99 = sbr.rel (0) target = $region25
    $region24: #{tpu_custom_call.1} parent=1 // pred_region
      %101 = dma.done [#allocation3], 128
    $region25: #{tpu_custom_call.1} parent=1 // pred_fallthru
      _
    %102 = vsyncpa [#allocation3], 1

</llo_original>
